<compile_context>
chip_gen: v6e
topology: v6e:2x2x1
jax: 0.10.0
libtpu: 0.0.40
codegen_flags: <defaults>
</compile_context>

<pallas_src>
import jax
import jax.numpy as jnp
from jax.experimental import pallas as pl
from jax.experimental.pallas import tpu as pltpu

_N_STATS = 6  # cols: [soft_inter, soft_pred_sum, target_count, hard_inter, hard_pred_count, ce_nll_sum]


def _stats_kernel(x_ref, t_ref, out_ref, acc_ref):
    # x_ref : (1, C, TP)  logits tile (classes on sublanes, pixels on lanes)
    # t_ref : (1, 1, TP)  int32 labels tile (lane-dense)
    # out_ref: (1, 1, C, 6) per-(split, sample) stats, written once at the last pixel tile
    # acc_ref: (C, 6) f32 VMEM accumulator, live across the pixel-tile grid axis
    k = pl.program_id(2)

    @pl.when(k == 0)
    def _():
        acc_ref[...] = jnp.zeros_like(acc_ref)

    x = x_ref[0].astype(jnp.float32)                                # (C, TP)
    t = t_ref[0]                                                    # (1, TP)
    c, tp = x.shape

    cls = jax.lax.broadcasted_iota(jnp.int32, (c, tp), 0)           # class id per sublane row
    onehot = (t == cls).astype(jnp.float32)                         # (C, TP) one-hot target

    # ---- soft-dice pieces (MONAI DiceLoss on raw logits) ----
    s_inter = jnp.sum(x * onehot, axis=1, keepdims=True)            # (C, 1)
    s_pred = jnp.sum(x, axis=1, keepdims=True)                      # (C, 1)
    cnt_t = jnp.sum(onehot, axis=1, keepdims=True)                  # (C, 1)

    # ---- hard prediction: first argmax over the class (sublane) axis ----
    xmax = jnp.max(x, axis=0, keepdims=True)                        # (1, TP)
    cand = jnp.where(x == xmax, cls, jnp.int32(c))
    amax = jnp.min(cand, axis=0, keepdims=True)                     # first max index, (1, TP)
    hmask = (cls == amax).astype(jnp.float32)                       # (C, TP) one-hot argmax
    h_inter = jnp.sum(hmask * onehot, axis=1, keepdims=True)        # (C, 1)
    cnt_h = jnp.sum(hmask, axis=1, keepdims=True)                   # (C, 1)

    # ---- cross-entropy pieces: per-pixel NLL of the true class, bucketed per class ----
    # exp only runs over the C real class rows (one sublane group for C <= 8).
    lse = xmax + jnp.log(jnp.sum(jnp.exp(x - xmax), axis=0, keepdims=True))   # (1, TP)
    x_true = jnp.sum(x * onehot, axis=0, keepdims=True)             # (1, TP)
    nll = lse - x_true                                              # (1, TP)
    ce_sum = jnp.sum(onehot * nll, axis=1, keepdims=True)           # (C, 1)

    acc_ref[...] += jnp.concatenate(
        [s_inter, s_pred, cnt_t, h_inter, cnt_h, ce_sum], axis=1)   # (C, 6)

    @pl.when(k == pl.num_programs(2) - 1)
    def _():
        out_ref[...] = acc_ref[...][None, None, :, :]


def _largest_tile(p, n_split, max_tile):
    """Largest multiple of 128 that divides p // n_split, capped at max_tile."""
    if p % n_split:
        return None
    chunk = p // n_split
    if chunk % 128:
        return None
    cap = min(max_tile, chunk)
    cap -= cap % 128
    for t in range(cap, 127, -128):
        if chunk % t == 0:
            return t
    return None


def _compute_stats(x_ncp, t_n1p, max_tile_px=4096):
    """Per-sample, per-class sufficient statistics; returns (N, C, 6) float32."""
    n, c, p = x_ncp.shape

    # Keep the double-buffered logits block modest in VMEM (<= ~2 MiB) so the same
    # tiling fits the smaller v7x scoped-VMEM budget.
    cap = max(128, min(max_tile_px, (2 * 1024 * 1024) // (4 * c)))
    cap -= cap % 128
    cap = max(cap, 128)

    n_split = 2                       # leading 'parallel' axis -> megacore coverage even for N == 1
    tile = _largest_tile(p, n_split, cap)
    if tile is None:
        n_split = 1
        tile = _largest_tile(p, 1, cap)
    if tile is None:
        # Ragged spatial size: pad the pixel axis.  Zero logits / label -1 contribute
        # nothing to any statistic used by the loss or metric (padded pixels argmax to
        # class 0, which is excluded from the hard-Dice metric).
        pad = (-p) % 256
        x_ncp = jnp.pad(x_ncp, ((0, 0), (0, 0), (0, pad)))
        t_n1p = jnp.pad(t_n1p, ((0, 0), (0, 0), (0, pad)), constant_values=-1)
        p += pad
        n_split = 2
        tile = _largest_tile(p, n_split, cap)

    tiles_per_split = p // (n_split * tile)
    grid = (n_split, n, tiles_per_split)

    def px_map(s, i, k):
        return (i, 0, s * tiles_per_split + k)

    parts = pl.pallas_call(
        _stats_kernel,
        out_shape=jax.ShapeDtypeStruct((n_split, n, c, _N_STATS), jnp.float32),
        grid_spec=pltpu.PrefetchScalarGridSpec(
            num_scalar_prefetch=0,
            grid=grid,
            in_specs=[
                pl.BlockSpec((1, c, tile), px_map),
                pl.BlockSpec((1, 1, tile), px_map),
            ],
            out_specs=pl.BlockSpec((1, 1, c, _N_STATS), lambda s, i, k: (s, i, 0, 0)),
            scratch_shapes=[pltpu.VMEM((c, _N_STATS), jnp.float32)],
        ),
        compiler_params=pltpu.CompilerParams(
            dimension_semantics=("parallel", "parallel", "arbitrary")),
    )(x_ncp, t_n1p)

    return jnp.sum(parts, axis=0)     # (N, C, 6)


class Criterion:
    """JAX/Pallas port of BaysianSeg Criterion (Balanced_DiceCELoss + Dice metric)."""

    def __init__(self, ce_loss_coef, dice_loss_coef, num_classes):
        self.lambda_ce = float(ce_loss_coef)
        self.lambda_dice = float(dice_loss_coef)
        self.num_classes = int(num_classes)
        self.smooth_nr = 1e-5
        self.smooth_dr = 1e-5

    def __call__(self, pred, grnd):
        logits = pred['pred_masks']                       # (N, C, H, W) float logits
        n, c, h, w = logits.shape
        # NCHW -> (N, C, H*W) is a free, contiguous reshape (no HBM transpose).
        # bf16 logits stay bf16 through HBM and are upcast inside the kernel.
        x = logits.reshape(n, c, h * w)
        if x.dtype != jnp.float32 and x.dtype != jnp.bfloat16:
            x = x.astype(jnp.float32)
        t = grnd.reshape(n, 1, h * w).astype(jnp.int32)

        stats = _compute_stats(x, t)                      # (N, C, 6)
        s_inter = stats[..., 0]
        s_pred = stats[..., 1]
        cnt_t = stats[..., 2]
        h_inter = stats[..., 3]
        cnt_h = stats[..., 4]
        ce_sum = stats[..., 5]

        numel = float(n * h * w)
        # torch.unique-based class weights; assumes every class is present in the target
        # (the original torch code errors otherwise).
        counts = jnp.sum(cnt_t, axis=0)                   # (C,)
        weight = 1.0 - counts / numel                     # (C,)

        # MONAI DiceLoss(include_background=True, to_onehot_y=True, reduction='none')
        dice_f = 1.0 - (2.0 * s_inter + self.smooth_nr) / (cnt_t + s_pred + self.smooth_dr)  # (N, C)
        dice_loss = jnp.mean(dice_f * weight[None, :])

        # weighted F.cross_entropy, reduction='mean'
        ce_loss = jnp.sum(weight * jnp.sum(ce_sum, axis=0)) / jnp.sum(weight * counts)

        total = self.lambda_dice * dice_loss + self.lambda_ce * ce_loss

        # hard Dice metric, include_background=False, then do_metric_reduction('mean')
        y_o = cnt_t[:, 1:]
        denom = y_o + cnt_h[:, 1:]
        dice_pc = jnp.where(y_o > 0, 2.0 * h_inter[:, 1:] / jnp.maximum(denom, 1e-12), jnp.nan)
        isnan = jnp.isnan(dice_pc)
        nn_row = jnp.sum(~isnan, axis=1).astype(jnp.float32)
        row_sum = jnp.sum(jnp.where(isnan, 0.0, dice_pc), axis=1)
        row_mean = jnp.where(nn_row > 0, row_sum / jnp.maximum(nn_row, 1.0), 0.0)
        valid = (nn_row > 0).astype(jnp.float32)
        dice_metric = jnp.sum(row_mean * valid) / jnp.maximum(jnp.sum(valid), 1.0)

        loss_dict = {'loss_Dice_CE': total, 'Dice': dice_metric}
        return total, loss_dict


def _reference(logits, labels, lambda_ce, lambda_dice):
    """Pure-JAX reference of the same forward (for correctness checking)."""
    n, c, h, w = logits.shape
    t = labels.reshape(n, h, w).astype(jnp.int32)
    onehot = jax.nn.one_hot(t, c, axis=1, dtype=jnp.float32)           # (N,C,H,W)
    inter = jnp.sum(logits * onehot, axis=(2, 3))
    pred_o = jnp.sum(logits, axis=(2, 3))
    grnd_o = jnp.sum(onehot, axis=(2, 3))
    counts = jnp.sum(grnd_o, axis=0)
    weight = 1.0 - counts / (n * h * w)
    dice_f = 1.0 - (2.0 * inter + 1e-5) / (grnd_o + pred_o + 1e-5)
    dice_loss = jnp.mean(dice_f * weight[None, :])
    logp = jax.nn.log_softmax(logits, axis=1)
    nll = -jnp.sum(logp * onehot, axis=1)                              # (N,H,W)
    wpix = weight[t]
    ce_loss = jnp.sum(wpix * nll) / jnp.sum(wpix)
    total = lambda_dice * dice_loss + lambda_ce * ce_loss
    amax = jnp.argmax(logits, axis=1)
    hpred = jax.nn.one_hot(amax, c, axis=1, dtype=jnp.float32)
    hi = jnp.sum(hpred * onehot, axis=(2, 3))[:, 1:]
    yo = grnd_o[:, 1:]
    po = jnp.sum(hpred, axis=(2, 3))[:, 1:]
    d = jnp.where(yo > 0, 2.0 * hi / (yo + po), jnp.nan)
    dice_metric = jnp.nanmean(d)
    return total, dice_metric


if __name__ == "__main__":
    key = jax.random.PRNGKey(0)
    N, C, H, W = 2, 4, 16, 16
    k1, k2 = jax.random.split(key)
    logits = jax.random.normal(k1, (N, C, H, W), dtype=jnp.float32)
    labels = jax.random.randint(k2, (N, 1, H, W), 0, C, dtype=jnp.int32)
    # guarantee every class appears in every sample (the torch.unique-based weight and
    # the metric/nanmean cross-check assume this)
    labels = labels.at[0, 0, 0, :C].set(jnp.arange(C, dtype=jnp.int32))
    labels = labels.at[1, 0, 0, :C].set(jnp.arange(C, dtype=jnp.int32))

    crit = Criterion(ce_loss_coef=1.0, dice_loss_coef=1.0, num_classes=C)
    total, loss_dict = crit({'pred_masks': logits}, labels)
    total = jax.block_until_ready(total)
    dice = jax.block_until_ready(loss_dict['Dice'])

    ref_total, ref_dice = _reference(logits, labels, 1.0, 1.0)
    assert jnp.allclose(total, ref_total, rtol=2e-4, atol=2e-4), (total, ref_total)
    assert jnp.allclose(dice, ref_dice, rtol=2e-4, atol=2e-4), (dice, ref_dice)
    print("KERNEL_OK")
</pallas_src>

<mosaic_0001>
module attributes {stable_mosaic.version = 11 : i64} {
  func.func @_stats_kernel(%arg0: i32, %arg1: i32, %arg2: i32, %arg3: memref<1x4x128xf32, #tpu.memory_space<vmem>>, %arg4: memref<1x1x128xi32, #tpu.memory_space<vmem>>, %arg5: memref<1x1x4x6xf32, #tpu.memory_space<vmem>>, %arg6: memref<4x6xf32, #tpu.memory_space<vmem>>) attributes {dimension_semantics = [#tpu.dimension_semantics<parallel>, #tpu.dimension_semantics<parallel>, #tpu.dimension_semantics<arbitrary>], iteration_bounds = array<i64: 2, 2, 1>, scalar_prefetch = 0 : i64, scratch_operands = 1 : i64, tpu.core_type = #tpu.core_type<tc>, window_params = [{transform_indices = @transform_0, window_bounds = array<i64: 1, 4, 128>}, {transform_indices = @transform_1, window_bounds = array<i64: 1, 1, 128>}, {transform_indices = @transform_2, window_bounds = array<i64: 1, 1, 4, 6>}]} {
    %c0_i32 = arith.constant 0 : i32
    %0 = arith.cmpi eq, %arg2, %c0_i32 : i32
    %1 = arith.extui %0 : i1 to i32
    %c0_i32_0 = arith.constant 0 : i32
    %2 = arith.cmpi ne, %1, %c0_i32_0 : i32
    scf.if %2 {
      %cst_21 = arith.constant 0.000000e+00 : f32
      %58 = vector.broadcast %cst_21 : f32 to vector<4x6xf32>
      %c0_22 = arith.constant 0 : index
      %c0_23 = arith.constant 0 : index
      %59 = vector.load %arg6[%c0_22, %c0_23] : memref<4x6xf32, #tpu.memory_space<vmem>>, vector<4x6xf32>
      tpu.vector_store %arg6[%c0_22, %c0_23], %58 {strides = array<i32>} : memref<4x6xf32, #tpu.memory_space<vmem>>, vector<4x6xf32>,
    } else {
    }
    %c0 = arith.constant 0 : index
    %c0_1 = arith.constant 0 : index
    %c0_2 = arith.constant 0 : index
    %3 = vector.load %arg3[%c0, %c0_1, %c0_2] : memref<1x4x128xf32, #tpu.memory_space<vmem>>, vector<1x4x128xf32>
    %4 = vector.shape_cast %3 : vector<1x4x128xf32> to vector<4x128xf32>
    %c0_3 = arith.constant 0 : index
    %c0_4 = arith.constant 0 : index
    %c0_5 = arith.constant 0 : index
    %5 = vector.load %arg4[%c0_3, %c0_4, %c0_5] : memref<1x1x128xi32, #tpu.memory_space<vmem>>, vector<1x1x128xi32>
    %6 = vector.shape_cast %5 : vector<1x1x128xi32> to vector<1x128xi32>
    %7 = tpu.iota {dimensions = array<i32: 0>} : vector<4x128xi32>
    %8 = vector.broadcast %6 : vector<1x128xi32> to vector<4x128xi32>
    %9 = arith.cmpi eq, %8, %7 : vector<4x128xi32>
    %10 = arith.extui %9 : vector<4x128xi1> to vector<4x128xi32>
    %11 = arith.sitofp %10 : vector<4x128xi32> to vector<4x128xf32>
    %12 = arith.mulf %4, %11 : vector<4x128xf32>
    %cst = arith.constant dense<0.000000e+00> : vector<4xf32>
    %13 = vector.multi_reduction <add>, %12, %cst [1] : vector<4x128xf32> to vector<4xf32>
    %14 = vector.shape_cast %13 : vector<4xf32> to vector<4x1xf32>
    %cst_6 = arith.constant dense<0.000000e+00> : vector<4xf32>
    %15 = vector.multi_reduction <add>, %4, %cst_6 [1] : vector<4x128xf32> to vector<4xf32>
    %16 = vector.shape_cast %15 : vector<4xf32> to vector<4x1xf32>
    %cst_7 = arith.constant dense<0.000000e+00> : vector<4xf32>
    %17 = vector.multi_reduction <add>, %11, %cst_7 [1] : vector<4x128xf32> to vector<4xf32>
    %18 = vector.shape_cast %17 : vector<4xf32> to vector<4x1xf32>
    %cst_8 = arith.constant dense<0xFF800000> : vector<128xf32>
    %19 = vector.multi_reduction <maximumf>, %4, %cst_8 [0] : vector<4x128xf32> to vector<128xf32>
    %20 = vector.shape_cast %19 : vector<128xf32> to vector<1x128xf32>
    %21 = vector.broadcast %20 : vector<1x128xf32> to vector<4x128xf32>
    %22 = arith.cmpf oeq, %4, %21 : vector<4x128xf32>
    %c4_i32 = arith.constant 4 : i32
    %23 = vector.broadcast %c4_i32 : i32 to vector<4x128xi32>
    %24 = arith.select %22, %7, %23 : vector<4x128xi1>, vector<4x128xi32>
    %cst_9 = arith.constant dense<2147483647> : vector<128xi32>
    %25 = vector.multi_reduction <minsi>, %24, %cst_9 [0] : vector<4x128xi32> to vector<128xi32>
    %26 = vector.shape_cast %25 : vector<128xi32> to vector<1x128xi32>
    %27 = vector.broadcast %26 : vector<1x128xi32> to vector<4x128xi32>
    %28 = arith.cmpi eq, %7, %27 : vector<4x128xi32>
    %29 = arith.extui %28 : vector<4x128xi1> to vector<4x128xi32>
    %30 = arith.sitofp %29 : vector<4x128xi32> to vector<4x128xf32>
    %31 = arith.mulf %30, %11 : vector<4x128xf32>
    %cst_10 = arith.constant dense<0.000000e+00> : vector<4xf32>
    %32 = vector.multi_reduction <add>, %31, %cst_10 [1] : vector<4x128xf32> to vector<4xf32>
    %33 = vector.shape_cast %32 : vector<4xf32> to vector<4x1xf32>
    %cst_11 = arith.constant dense<0.000000e+00> : vector<4xf32>
    %34 = vector.multi_reduction <add>, %30, %cst_11 [1] : vector<4x128xf32> to vector<4xf32>
    %35 = vector.shape_cast %34 : vector<4xf32> to vector<4x1xf32>
    %36 = vector.broadcast %20 : vector<1x128xf32> to vector<4x128xf32>
    %37 = arith.subf %4, %36 : vector<4x128xf32>
    %38 = math.exp %37 : vector<4x128xf32>
    %cst_12 = arith.constant dense<0.000000e+00> : vector<128xf32>
    %39 = vector.multi_reduction <add>, %38, %cst_12 [0] : vector<4x128xf32> to vector<128xf32>
    %40 = vector.shape_cast %39 : vector<128xf32> to vector<1x128xf32>
    %41 = math.log %40 : vector<1x128xf32>
    %42 = arith.addf %20, %41 : vector<1x128xf32>
    %43 = arith.mulf %4, %11 : vector<4x128xf32>
    %cst_13 = arith.constant dense<0.000000e+00> : vector<128xf32>
    %44 = vector.multi_reduction <add>, %43, %cst_13 [0] : vector<4x128xf32> to vector<128xf32>
    %45 = vector.shape_cast %44 : vector<128xf32> to vector<1x128xf32>
    %46 = arith.subf %42, %45 : vector<1x128xf32>
    %47 = vector.broadcast %46 : vector<1x128xf32> to vector<4x128xf32>
    %48 = arith.mulf %11, %47 : vector<4x128xf32>
    %cst_14 = arith.constant dense<0.000000e+00> : vector<4xf32>
    %49 = vector.multi_reduction <add>, %48, %cst_14 [1] : vector<4x128xf32> to vector<4xf32>
    %50 = vector.shape_cast %49 : vector<4xf32> to vector<4x1xf32>
    %c0_15 = arith.constant 0 : index
    %c0_16 = arith.constant 0 : index
    %51 = vector.load %arg6[%c0_15, %c0_16] : memref<4x6xf32, #tpu.memory_space<vmem>>, vector<4x6xf32>
    %52 = tpu.concatenate %14, %16, %18, %33, %35, %50 in 1 : vector<4x1xf32>, vector<4x1xf32>, vector<4x1xf32>, vector<4x1xf32>, vector<4x1xf32>, vector<4x1xf32> -> vector<4x6xf32>
    %53 = arith.addf %51, %52 : vector<4x6xf32>
    %c0_17 = arith.constant 0 : index
    %c0_18 = arith.constant 0 : index
    %54 = vector.load %arg6[%c0_17, %c0_18] : memref<4x6xf32, #tpu.memory_space<vmem>>, vector<4x6xf32>
    tpu.vector_store %arg6[%c0_17, %c0_18], %53 {strides = array<i32>} : memref<4x6xf32, #tpu.memory_space<vmem>>, vector<4x6xf32>,
    %c0_i32_19 = arith.constant 0 : i32
    %55 = arith.cmpi eq, %arg2, %c0_i32_19 : i32
    %56 = arith.extui %55 : i1 to i32
    %c0_i32_20 = arith.constant 0 : i32
    %57 = arith.cmpi ne, %56, %c0_i32_20 : i32
    scf.if %57 {
      %c0_21 = arith.constant 0 : index
      %c0_22 = arith.constant 0 : index
      %58 = vector.load %arg6[%c0_21, %c0_22] : memref<4x6xf32, #tpu.memory_space<vmem>>, vector<4x6xf32>
      %59 = vector.shape_cast %58 : vector<4x6xf32> to vector<1x1x4x6xf32>
      %c0_23 = arith.constant 0 : index
      %c0_24 = arith.constant 0 : index
      %c0_25 = arith.constant 0 : index
      %c0_26 = arith.constant 0 : index
      %60 = vector.load %arg5[%c0_23, %c0_24, %c0_25, %c0_26] : memref<1x1x4x6xf32, #tpu.memory_space<vmem>>, vector<1x1x4x6xf32>
      tpu.vector_store %arg5[%c0_23, %c0_24, %c0_25, %c0_26], %59 {strides = array<i32>} : memref<1x1x4x6xf32, #tpu.memory_space<vmem>>, vector<1x1x4x6xf32>,
    } else {
    }
    return
  }
  func.func @transform_0(%arg0: i32, %arg1: i32, %arg2: i32) -> (i32, i32, i32) {
    %c1_i32 = arith.constant 1 : i32
    %0 = arith.muli %arg0, %c1_i32 : i32
    %1 = arith.addi %0, %arg2 : i32
    %c0_i32 = arith.constant 0 : i32
    %c0_i32_0 = arith.constant 0 : i32
    return %arg1, %c0_i32, %1 : i32, i32, i32
  }
  func.func @transform_1(%arg0: i32, %arg1: i32, %arg2: i32) -> (i32, i32, i32) {
    %c1_i32 = arith.constant 1 : i32
    %0 = arith.muli %arg0, %c1_i32 : i32
    %1 = arith.addi %0, %arg2 : i32
    %c0_i32 = arith.constant 0 : i32
    %c0_i32_0 = arith.constant 0 : i32
    return %arg1, %c0_i32, %1 : i32, i32, i32
  }
  func.func @transform_2(%arg0: i32, %arg1: i32, %arg2: i32) -> (i32, i32, i32, i32) {
    %c0_i32 = arith.constant 0 : i32
    %c0_i32_0 = arith.constant 0 : i32
    %c0_i32_1 = arith.constant 0 : i32
    return %arg0, %arg1, %c0_i32, %c0_i32_0 : i32, i32, i32, i32
  }
}

</mosaic_0001>

<llo_original>
// kernel: tpu_custom_call.1
$region0: #{tpu_custom_call.1}
  #allocation0 [shape = 'u32[]', space=smem, size = 0x4, offset = 0x4, fixed_abs, tag = 'smem constant byte address 0x4 - core index']
  #allocation1 [shape = 'u32[144,128]{1,0:T(1,128)}', space=vmem, size = 0x12000, scoped, tag = 'internal scratch']
  #allocation2 [shape = 'f32[4,6]{1,0:T(4,128)}', space=vmem, size = 0x800, scoped, tag = 'scratch operand']
  %s0 = inlined_call_operand.hbm [shape: f32[2,4,256], index: 0, kind: input, shape index: {}]
  %s1 = inlined_call_operand.hbm [shape: s32[2,1,256], index: 1, kind: input, shape index: {}]
  %s2 = inlined_call_operand.hbm [shape: f32[2,2,4,6], index: 2, kind: output, shape index: {}]
  %s3 = sld [smem:[#allocation0]]
  $region57: #{tpu_custom_call.1} parent=0
    _
  %s5 = ssub.s32 1, %s3
  %s6 = scalar_select 0, %s5, %s3
  $region1: #{tpu_custom_call.1} parent=0
    #allocation3 [shape = 'u8[4096]{0}', space=vmem, size = 0x1000, scoped, tag = 'input window, operand 0']
    #allocation4 [shape = 's32[2]{0}', space=sflag, size = 0x8, scoped, tag = 'scoped memory for tpu_custom_call.1']
    #allocation5 [shape = 's32[2]{0}', space=sflag, size = 0x8, scoped, tag = 'scoped memory for tpu_custom_call.1']
    #allocation6 [shape = 'u8[1024]{0}', space=vmem, size = 0x400, scoped, tag = 'input window, operand 1']
    #allocation7 [shape = 's32[2]{0}', space=sflag, size = 0x8, scoped, tag = 'scoped memory for tpu_custom_call.1']
    #allocation8 [shape = 'u8[4096]{0}', space=vmem, size = 0x1000, scoped, tag = 'output window, operand 0']
    %7 = vsyncpa [#allocation4], 0
    %s8 = scalar_lea.sflag [#allocation4], 1
    %9 = vsyncpa %s8, 0
    %10 = vsyncpa [#allocation7], 0
    %s11 = scalar_lea.sflag [#allocation7], 1
    %12 = vsyncpa %s11, 0
    %13 = vsyncpa [#allocation5], 0
    %s14 = scalar_lea.sflag [#allocation5], 1
    %15 = vsyncpa %s14, 0
    loop: start=0, step=1, limit=6
    $region2: #{tpu_custom_call.1} parent=1 // loop_pre_header
      _
    $region3: #{tpu_custom_call.1} parent=1 // loop_header
      %s17 = sphi 0, %s21
      %p18 = scmp.ge.s32.totalorder %s17, 6
      %s24 = sphi 0, %s43
      %s25 = sphi 0, %s39
      %s26 = sphi 0, %s35
      %s27 = sphi 0, %s24
      %s28 = sphi 0, %s25
      %s29 = sphi 0, %s26
      %s30 = sphi 0, %s27
      %s31 = sphi 0, %s28
      %s32 = sphi 0, %s29
      %s50 = sphi 0, %s52
      %s53 = sphi 0, %s50
      %s54 = sphi 0, %s53
      %s70 = sphi 0, %s54
      %s80 = sphi 0, %s82
      %s83 = sphi 0, %s80
      %s84 = sphi 0, %s83
      %s100 = sphi 0, %s84
      %s108 = sphi 0, %s110
      %s111 = sphi 0, %s108
      %s112 = sphi 0, %s111
      %s128 = sphi 0, %s112
    $region4: #{tpu_custom_call.1} parent=1 // loop_header_branch
      %20 = sbr.rel (%p18) target = $region8
    $region5: #{tpu_custom_call.1} parent=1 // loop_body
      %s22 = ssub.s32 %s17, 1
      %s23 = ssub.s32 %s17, 2
      %s33 = sadd.s32 1, %s26
      %p34 = scmp.ge.s32.totalorder %s33, 1
      %s35 = scalar_select %p34, 0, %s33
      %s36 = sadd.s32 1, %s25
      %s37 = scalar_select %p34, %s36, %s25
      %p38 = scmp.ge.s32.totalorder %s37, 2
      %s39 = scalar_select %p38, 0, %s37
      %s40 = sadd.s32 1, %s24
      %s41 = scalar_select %p38, %s40, %s24
      %p42 = scmp.ge.s32.totalorder %s41, 2
      %s43 = scalar_select %p42, 0, %s41
      %s44 = sadd.s32 %s24, %s26
      %s45 = sadd.s32 %s43, %s35
      %s46 = ssub.s32 %s25, %s39
      %s47 = ssub.s32 %s44, %s45
      %s48 = sor.u32 %s46, %s47
      %p49 = scmp.eq.s32.totalorder %s48, 0
      %s51 = sadd.s32 %s50, 1
      %s52 = scalar_select %p49, %s50, %s51
      %p55 = pneg %p49
      %p56 = scmp.eq.s32.totalorder %s17, 3
      %p57 = por %p55, %p56
      %p58 = scmp.ne.s32.totalorder %s50, %s53
      %p59 = scmp.eq.s32.totalorder %s17, 0
      %p60 = por %p58, %p59
      %p61 = scmp.ne.s32.totalorder %s50, %s53
      %p62 = scmp.eq.s32.totalorder %s22, 3
      %p63 = por %p61, %p62
      %p64 = scmp.ne.s32.totalorder %s53, %s54
      %p65 = scmp.eq.s32.totalorder %s22, 0
      %p66 = por %p64, %p65
      %p67 = scmp.ne.s32.totalorder %s53, %s54
      %p68 = scmp.eq.s32.totalorder %s23, 3
      %p69 = por %p67, %p68
      %p71 = scmp.ne.s32.totalorder %s54, %s70
      %p72 = scmp.eq.s32.totalorder %s23, 0
      %p73 = por %p71, %p72
      %s74 = sadd.s32 %s24, %s26
      %s75 = sadd.s32 %s43, %s35
      %s76 = ssub.s32 %s25, %s39
      %s77 = ssub.s32 %s74, %s75
      %s78 = sor.u32 %s76, %s77
      %p79 = scmp.eq.s32.totalorder %s78, 0
      %s81 = sadd.s32 %s80, 1
      %s82 = scalar_select %p79, %s80, %s81
      %p85 = pneg %p79
      %p86 = scmp.eq.s32.totalorder %s17, 3
      %p87 = por %p85, %p86
      %p88 = scmp.ne.s32.totalorder %s80, %s83
      %p89 = scmp.eq.s32.totalorder %s17, 0
      %p90 = por %p88, %p89
      %p91 = scmp.ne.s32.totalorder %s80, %s83
      %p92 = scmp.eq.s32.totalorder %s22, 3
      %p93 = por %p91, %p92
      %p94 = scmp.ne.s32.totalorder %s83, %s84
      %p95 = scmp.eq.s32.totalorder %s22, 0
      %p96 = por %p94, %p95
      %p97 = scmp.ne.s32.totalorder %s83, %s84
      %p98 = scmp.eq.s32.totalorder %s23, 3
      %p99 = por %p97, %p98
      %p101 = scmp.ne.s32.totalorder %s84, %s100
      %p102 = scmp.eq.s32.totalorder %s23, 0
      %p103 = por %p101, %p102
      %s104 = ssub.s32 %s24, %s43
      %s105 = ssub.s32 %s25, %s39
      %s106 = sor.u32 %s104, %s105
      %p107 = scmp.eq.s32.totalorder %s106, 0
      %s109 = sadd.s32 %s108, 1
      %s110 = scalar_select %p107, %s108, %s109
      %p113 = pneg %p107
      %p114 = scmp.eq.s32.totalorder %s17, 3
      %p115 = por %p113, %p114
      %p116 = scmp.ne.s32.totalorder %s108, %s111
      %p117 = scmp.eq.s32.totalorder %s17, 0
      %p118 = por %p116, %p117
      %p119 = scmp.ne.s32.totalorder %s108, %s111
      %p120 = scmp.eq.s32.totalorder %s22, 3
      %p121 = por %p119, %p120
      %p122 = scmp.ne.s32.totalorder %s111, %s112
      %p123 = scmp.eq.s32.totalorder %s22, 0
      %p124 = por %p122, %p123
      %p125 = scmp.ne.s32.totalorder %s111, %s112
      %p126 = scmp.eq.s32.totalorder %s23, 3
      %p127 = por %p125, %p126
      %p129 = scmp.ne.s32.totalorder %s112, %s128
      %p130 = scmp.eq.s32.totalorder %s23, 0
      %p131 = por %p129, %p130
      %p132 = scmp.le.s32.totalorder 1, %s17
      %p133 = scmp.lt.s32.totalorder %s17, 5
      %p134 = pnand %p132, %p133
      %p135 = pneg %p134
      // Predicated region
      $region9: #{tpu_custom_call.1} parent=5 // pred_check
        _
      $region10: #{tpu_custom_call.1} parent=5 // pred_check_branch
        %137 = sbr.rel (%p134) target = $region12
      $region11: #{tpu_custom_call.1} parent=5 // pred_region
        %s138 = ssub.s32 %s17, 1
      $region12: #{tpu_custom_call.1} parent=5 // pred_fallthru
        _
      %p139 = scmp.lt.s32.totalorder %s17, 4
      // Predicated region
      $region13: #{tpu_custom_call.1} parent=5 // pred_check
        %p140 = pneg %p139
      $region14: #{tpu_custom_call.1} parent=5 // pred_check_branch
        %142 = sbr.rel (%p140) target = $region16
      $region15: #{tpu_custom_call.1} parent=5 // pred_region
        // Predicated region
        $region17: #{tpu_custom_call.1} parent=15 // pred_check
          %p143 = pneg %p60
        $region18: #{tpu_custom_call.1} parent=15 // pred_check_branch
          %145 = sbr.rel (%p143) target = $region20
        $region19: #{tpu_custom_call.1} parent=15 // pred_region
          %s146 = sand.u32 %s50, 1
          %s147 = scalar_lea.sflag [#allocation4], %s146
          %s148 = sand.u32 %s50, 1
          %s149 = smul.addr %s148, 4
          %s150 = scalar_lea.vmem [#allocation3], %s149
          %s151 = sadd.s32 %s24, %s26
          %s153 = ssub.s32 64, 64
          %154 = vsyncadd %s147, %s153
          %s155 = smul.addr %s25, 2
          %s156 = sadd.s32 %s151, %s155
          %s157 = smul.addr %s156, 64
          %s158 = scalar_lea.hbm %s0, %s157
          %s160 = sshll.u32 %s150, 4
          %s161 = int_to_ptr.vmem [resolvable:$true] %s160
          %163 = dma.hbm_to_vmem [thread:$0]  %s158, 64, %s161, %s147
        $region20: #{tpu_custom_call.1} parent=15 // pred_fallthru
          _
        // Predicated region
        $region21: #{tpu_custom_call.1} parent=15 // pred_check
          %p164 = pneg %p90
        $region22: #{tpu_custom_call.1} parent=15 // pred_check_branch
          %166 = sbr.rel (%p164) target = $region24
        $region23: #{tpu_custom_call.1} parent=15 // pred_region
          %s167 = sand.u32 %s80, 1
          %s168 = scalar_lea.sflag [#allocation7], %s167
          %s169 = sand.u32 %s80, 1
          %s170 = scalar_lea.vmem [#allocation6], %s169
          %s171 = sadd.s32 %s24, %s26
          %s173 = ssub.s32 16, 16
          %174 = vsyncadd %s168, %s173
          %s175 = smul.addr %s25, 2
          %s176 = sadd.s32 %s171, %s175
          %s177 = smul.addr %s176, 16
          %s178 = scalar_lea.hbm %s1, %s177
          %s180 = sshll.u32 %s170, 4
          %s181 = int_to_ptr.vmem [resolvable:$true] %s180
          %183 = dma.hbm_to_vmem [thread:$0]  %s178, 16, %s181, %s168
        $region24: #{tpu_custom_call.1} parent=15 // pred_fallthru
          _
      $region16: #{tpu_custom_call.1} parent=5 // pred_fallthru
        _
      %p184 = scmp.le.s32.totalorder 1, %s17
      %p185 = scmp.lt.s32.totalorder %s17, 5
      %p186 = pnand %p184, %p185
      %p187 = pneg %p186
      // Predicated region
      $region25: #{tpu_custom_call.1} parent=5 // pred_check
        _
      $region26: #{tpu_custom_call.1} parent=5 // pred_check_branch
        %189 = sbr.rel (%p186) target = $region28
      $region27: #{tpu_custom_call.1} parent=5 // pred_region
        %s190 = ssub.s32 %s17, 1
        %s191 = sand.u32 %s53, 1
        %s192 = scalar_lea.sflag [#allocation4], %s191
        %s193 = sand.u32 %s53, 1
        %s194 = smul.addr %s193, 4
        %s195 = scalar_lea.vmem [#allocation3], %s194
        // Predicated region
        $region29: #{tpu_custom_call.1} parent=27 // pred_check
          %p196 = pneg %p66
        $region30: #{tpu_custom_call.1} parent=27 // pred_check_branch
          %198 = sbr.rel (%p196) target = $region32
        $region31: #{tpu_custom_call.1} parent=27 // pred_region
          %199 = dma.done %s192, 64
        $region32: #{tpu_custom_call.1} parent=27 // pred_fallthru
          _
        %s200 = sand.u32 %s83, 1
        %s201 = scalar_lea.sflag [#allocation7], %s200
        %s202 = sand.u32 %s83, 1
        %s203 = scalar_lea.vmem [#allocation6], %s202
        // Predicated region
        $region33: #{tpu_custom_call.1} parent=27 // pred_check
          %p204 = pneg %p96
        $region34: #{tpu_custom_call.1} parent=27 // pred_check_branch
          %206 = sbr.rel (%p204) target = $region36
        $region35: #{tpu_custom_call.1} parent=27 // pred_region
          %207 = dma.done %s201, 16
        $region36: #{tpu_custom_call.1} parent=27 // pred_fallthru
          _
        %s208 = sand.u32 %s53, 1
        %s209 = scalar_lea.sflag [#allocation4], %s208
        %s210 = sand.u32 %s53, 1
        %s211 = smul.addr %s210, 4
        %s212 = scalar_lea.vmem [#allocation3], %s211
        %p213 = pneg %p66
        %p214 = pneg %p63
        %s215 = sand.u32 %s83, 1
        %s216 = scalar_lea.sflag [#allocation7], %s215
        %s217 = sand.u32 %s83, 1
        %s218 = scalar_lea.vmem [#allocation6], %s217
        %p219 = pneg %p96
        %p220 = pneg %p93
        %p221 = pneg %p124
        %p222 = pneg %p121
        %s223 = sand.u32 %s111, 1
        %s224 = scalar_lea.sflag [#allocation5], %s223
        %s225 = sand.u32 %s111, 1
        %s226 = smul.addr %s225, 4
        %s227 = scalar_lea.vmem [#allocation8], %s226
        %s228 = sadd.s32 %s27, %s29
        %s229 = sadd.s32 %s27, %s29
        %p230 = scmp.eq.s32.totalorder %s29, 0
        // Predicated region
        $region37: #{tpu_custom_call.1} parent=27 // pred_check
          %p231 = pneg %p230
        $region38: #{tpu_custom_call.1} parent=27 // pred_check_branch
          %233 = sbr.rel (%p231) target = $region40
        $region39: #{tpu_custom_call.1} parent=27 // pred_region
          %vm234 = vcmask 44032
          %235 = vst.msk [vmem:[#allocation2] sm:$0xf] %vm234, 0.0
        $region40: #{tpu_custom_call.1} parent=27 // pred_fallthru
          _
        %v236 = vld [vmem:[%s195] sm:$0xf]
        %v237 = vld [vmem:[%s203] sm:$0x1]
        %v238 = vlaneseq
        %v239 = vshrl.u32 %v238, 7
        %v240 = vlaneseq
        %v241 = vshrl.u32 %v240, 7
        %v242 = vsub.s32 0, %v241
        %v243 = vrot.slane %v237, %v242
        %vm244 = vcmp.eq.s32.totalorder %v243, %v239
        %v245 = vsel %vm244, 1, 0
        %v246 = vcvt.s32.f32 %v245
        %v247 = vmul.f32 %v236, %v246
        %vm248 = vcmask 1043456
        %v249 = vsel %vm248, %v247, 0.0
        %250 = vadd.xlane.f32.xlu0 %v249
        %v251 = vpop.xlane.xlu0 %250
        %v252 = vsel %vm248, %v236, 0.0
        %253 = vadd.xlane.f32.xlu0 %v252
        %v254 = vpop.xlane.xlu0 %253
        %v255 = vsel %vm248, %v246, 0.0
        %256 = vadd.xlane.f32.xlu0 %v255
        %v257 = vpop.xlane.xlu0 %256
        %v258 = vsel %vm248, %v236, -inf
        %v259 = vrot.slane %v258, 4
        %v260 = vmax.f32 %v258, %v259
        %v261 = vrot.slane %v260, 2
        %v262 = vmax.f32 %v260, %v261
        %v263 = vrot.slane %v262, 1
        %v264 = vmax.f32 %v262, %v263
        %vm265 = vcmp.eq.f32.partialorder %v236, %v264
        %v266 = vsel %vm265, %v239, 4
        %v267 = vsel %vm248, %v266, 2147483647
        %v268 = vrot.slane %v267, 4
        %vm269 = vcmp.lt.s32.totalorder %v267, %v268
        %v270 = vsel %vm269, %v267, %v268
        %v271 = vrot.slane %v270, 2
        %vm272 = vcmp.lt.s32.totalorder %v270, %v271
        %v273 = vsel %vm272, %v270, %v271
        %v274 = vrot.slane %v273, 1
        %vm275 = vcmp.lt.s32.totalorder %v273, %v274
        %v276 = vsel %vm275, %v273, %v274
        %vm277 = vcmp.eq.s32.totalorder %v239, %v276
        %v278 = vsel %vm277, 1, 0
        %v279 = vcvt.s32.f32 %v278
        %v280 = vmul.f32 %v279, %v246
        %v281 = vsel %vm248, %v280, 0.0
        %282 = vadd.xlane.f32.xlu0 %v281
        %v283 = vpop.xlane.xlu0 %282
        %v284 = vsel %vm248, %v279, 0.0
        %285 = vadd.xlane.f32.xlu0 %v284
        %v286 = vpop.xlane.xlu0 %285
        %v287 = vsub.f32 %v236, %v264
        %v288 = vmul.f32 %v287, 1.442695
        %v289 = vpow.pop %v288
        %v290 = vsel %vm248, %v289, 0.0
        %v291 = vrot.slane %v290, 4
        %v292 = vadd.f32 %v290, %v291
        %v293 = vrot.slane %v292, 2
        %v294 = vadd.f32 %v292, %v293
        %v295 = vrot.slane %v294, 1
        %v296 = vadd.f32 %v294, %v295
        %v297 = vlog2.pop %v296
        %v298 = vmul.f32 %v297, 0.6931472
        %v299 = vadd.f32 %v264, %v298
        %v300 = vrot.slane %v249, 4
        %v301 = vadd.f32 %v249, %v300
        %v302 = vrot.slane %v301, 2
        %v303 = vadd.f32 %v301, %v302
        %v304 = vrot.slane %v303, 1
        %v305 = vadd.f32 %v303, %v304
        %v306 = vsub.f32 %v299, %v305
        %v307 = vmul.f32 %v246, %v306
        %v308 = vsel %vm248, %v307, 0.0
        %309 = vadd.xlane.f32.xlu0 %v308
        %v310 = vpop.xlane.xlu0 %309
        %v311 = vld [vmem:[#allocation2] sm:$0xf]
        %vm312 = vcmask 7168
        %v313 = vsel %vm312, %v251, %v254
        %vm314 = vcmask 15360
        %v315 = vsel %vm314, %v313, %v257
        %vm316 = vcmask 23552
        %v317 = vsel %vm316, %v315, %v283
        %vm318 = vcmask 31744
        %v319 = vsel %vm318, %v317, %v286
        %vm320 = vcmask 39936
        %v321 = vsel %vm320, %v319, %v310
        %v322 = vadd.f32 %v311, %v321
        %vm323 = vcmask 44032
        %324 = vst.msk [vmem:[#allocation2] sm:$0xf] %vm323, %v322
        // Predicated region
        $region41: #{tpu_custom_call.1} parent=27 // pred_check
          %p325 = pneg %p230
        $region42: #{tpu_custom_call.1} parent=27 // pred_check_branch
          %327 = sbr.rel (%p325) target = $region44
        $region43: #{tpu_custom_call.1} parent=27 // pred_region
          %v328 = vld [vmem:[#allocation2] sm:$0xf]
          %329 = vst.msk [vmem:[%s227] sm:$0xf] %vm323, %v328
        $region44: #{tpu_custom_call.1} parent=27 // pred_fallthru
          _
        %s330 = sand.u32 %s111, 1
        %s331 = scalar_lea.sflag [#allocation5], %s330
        %s332 = sand.u32 %s111, 1
        %s333 = smul.addr %s332, 4
        %s334 = scalar_lea.vmem [#allocation8], %s333
        // Predicated region
        $region45: #{tpu_custom_call.1} parent=27 // pred_check
          %p335 = pneg %p121
        $region46: #{tpu_custom_call.1} parent=27 // pred_check_branch
          %337 = sbr.rel (%p335) target = $region48
        $region47: #{tpu_custom_call.1} parent=27 // pred_region
          %s339 = ssub.s32 64, 64
          %340 = vsyncadd %s331, %s339
          %s341 = smul.addr %s27, 2
          %s342 = sadd.s32 %s28, %s341
          %s343 = smul.addr %s342, 64
          %s344 = scalar_lea.hbm %s2, %s343
          %s346 = sshll.u32 %s334, 4
          %s347 = int_to_ptr.vmem [resolvable:$true] %s346
          %349 = dma.vmem_to_hbm [thread:$0]  %s347, 64, %s344, %s331
        $region48: #{tpu_custom_call.1} parent=27 // pred_fallthru
          _
      $region28: #{tpu_custom_call.1} parent=5 // pred_fallthru
        _
      %p350 = scmp.le.s32.totalorder 2, %s17
      // Predicated region
      $region49: #{tpu_custom_call.1} parent=5 // pred_check
        %p351 = pneg %p350
      $region50: #{tpu_custom_call.1} parent=5 // pred_check_branch
        %353 = sbr.rel (%p351) target = $region52
      $region51: #{tpu_custom_call.1} parent=5 // pred_region
        %s354 = ssub.s32 %s17, 2
        // Predicated region
        $region53: #{tpu_custom_call.1} parent=51 // pred_check
          %p355 = pneg %p127
        $region54: #{tpu_custom_call.1} parent=51 // pred_check_branch
          %357 = sbr.rel (%p355) target = $region56
        $region55: #{tpu_custom_call.1} parent=51 // pred_region
          %s358 = sand.u32 %s112, 1
          %s359 = scalar_lea.sflag [#allocation5], %s358
          %s360 = sand.u32 %s112, 1
          %s361 = smul.addr %s360, 4
          %s362 = scalar_lea.vmem [#allocation8], %s361
          %363 = dma.done %s359, 64
        $region56: #{tpu_custom_call.1} parent=51 // pred_fallthru
          _
      $region52: #{tpu_custom_call.1} parent=5 // pred_fallthru
        _
    $region6: #{tpu_custom_call.1} parent=1 // loop_footer
      %s21 = sadd.s32 1, %s17
    $region7: #{tpu_custom_call.1} parent=1 // loop_footer_branch
      %16 = sbr.rel target = $region3
    $region8: #{tpu_custom_call.1} parent=1 // loop_exit
      _
    %364 = vsyncpa [#allocation4], 1
    %s365 = scalar_lea.sflag [#allocation4], 1
    %366 = vsyncpa %s365, 1
    %367 = vsyncpa [#allocation7], 1
    %s368 = scalar_lea.sflag [#allocation7], 1
    %369 = vsyncpa %s368, 1
    %370 = vsyncpa [#allocation5], 1
    %s371 = scalar_lea.sflag [#allocation5], 1
    %372 = vsyncpa %s371, 1

</llo_original>
